<compile_context>
chip_gen: v6e
topology: v6e:2x2x1
jax: 0.10.0
libtpu: 0.0.40
codegen_flags: <defaults>
</compile_context>

<pallas_src>
import functools

import jax
import jax.numpy as jnp
from jax.experimental import pallas as pl
from jax.experimental.pallas import tpu as pltpu


def _round_up(x, m):
    return ((x + m - 1) // m) * m


def _proj_kernel(x_ref, w_ref, b_ref, o_ref):
    # x_ref: [TM, Kp], w_ref: [Kp, Np], b_ref: [1, Np], o_ref: [TM, Np]
    acc = jnp.dot(x_ref[...], w_ref[...], preferred_element_type=jnp.float32)
    o_ref[...] = (acc + b_ref[...]).astype(o_ref.dtype)


def _proj_norm_kernel(x_ref, w_ref, b_ref, g_ref, beta_ref, bmean_ref, o_ref,
                      *, eps):
    # Projection + per-segment LayerNorm on the packed [TM, Np] layout.
    acc = jnp.dot(x_ref[...], w_ref[...], preferred_element_type=jnp.float32)
    acc = acc + b_ref[...]
    # bmean_ref[a, b] = 1/embed_dim iff lane `a` is a real lane in the same
    # 32-lane segment as lane `b` (else 0).  One matmul therefore produces the
    # per-segment mean broadcast back across that segment's lanes; a second
    # matmul on the centered squares gives the (biased, as nn.LayerNorm uses)
    # variance.  Centered two-pass -> no catastrophic cancellation; both
    # reductions run on the MXU instead of the XLU.
    mean = jnp.dot(acc, bmean_ref[...], preferred_element_type=jnp.float32)
    centered = acc - mean
    var = jnp.dot(centered * centered, bmean_ref[...],
                  preferred_element_type=jnp.float32)
    xhat = centered * jax.lax.rsqrt(var + eps)
    # gamma/beta tiled per segment (zeros on any padded lanes).
    o_ref[...] = (xhat * g_ref[...] + beta_ref[...]).astype(o_ref.dtype)


class PatchEmbedPallas:
    """JAX/Pallas equivalent of the PyTorch PatchEmbed module."""

    def __init__(self, img_size=16, patch_size=4, in_chans=4, embed_dim=32,
                 use_norm=False, compute_dtype=jnp.float32, out_dtype=None,
                 key=None):
        self.img_size = (img_size, img_size)
        self.patch_size = (patch_size, patch_size)
        self.patches_resolution = [img_size // patch_size, img_size // patch_size]
        self.num_patches = self.patches_resolution[0] * self.patches_resolution[1]
        self.in_chans = in_chans
        self.embed_dim = embed_dim
        self.use_norm = use_norm
        self.compute_dtype = compute_dtype
        self.out_dtype = compute_dtype if out_dtype is None else out_dtype
        self.eps = 1e-5

        if key is None:
            key = jax.random.PRNGKey(0)
        kw, kb = jax.random.split(key)
        # Conv2d weight: [embed_dim, in_chans, ph, pw], bias: [embed_dim]
        fan_in = in_chans * patch_size * patch_size
        bound = 1.0 / (fan_in ** 0.5)
        self.conv_w = jax.random.uniform(
            kw, (embed_dim, in_chans, patch_size, patch_size),
            dtype=jnp.float32, minval=-bound, maxval=bound)
        self.conv_b = jax.random.uniform(
            kb, (embed_dim,), dtype=jnp.float32, minval=-bound, maxval=bound)
        # LayerNorm params (deterministic identity-style init).
        self.ln_gamma = jnp.ones((embed_dim,), jnp.float32)
        self.ln_beta = jnp.zeros((embed_dim,), jnp.float32)

        # ---- precompute kernel-side weights once (no per-call relayout) ----
        K = in_chans * patch_size * patch_size
        # Pack `pack` patches per 128-lane output row when embed_dim divides 128.
        if embed_dim <= 128 and 128 % embed_dim == 0:
            pack = 128 // embed_dim
            n_pad = 128
            seg_w = embed_dim                      # no intra-segment lane padding
        else:
            pack = 1
            n_pad = _round_up(embed_dim, 128)
            seg_w = n_pad
        self._K = K
        self._pack = pack
        self._seg_w = seg_w
        self._n_pad = n_pad
        self._Kp = pack * K

        w2d = self.conv_w.reshape(embed_dim, K).T   # [K, embed_dim]
        wblk = jnp.zeros((self._Kp, n_pad), compute_dtype)
        b2d = jnp.zeros((1, n_pad), jnp.float32)
        g2d = jnp.zeros((1, n_pad), jnp.float32)
        beta2d = jnp.zeros((1, n_pad), jnp.float32)
        bmean = jnp.zeros((n_pad, n_pad), jnp.float32)
        for p in range(pack):
            c0 = p * seg_w
            wblk = wblk.at[p * K:(p + 1) * K,
                           c0:c0 + embed_dim].set(w2d.astype(compute_dtype))
            b2d = b2d.at[:, c0:c0 + embed_dim].set(self.conv_b)
            g2d = g2d.at[:, c0:c0 + embed_dim].set(self.ln_gamma)
            beta2d = beta2d.at[:, c0:c0 + embed_dim].set(self.ln_beta)
            # Source rows: only the real lanes of segment p.  Target columns:
            # every lane of segment p (broadcast of the per-segment stat).
            bmean = bmean.at[c0:c0 + embed_dim, c0:c0 + seg_w].set(
                jnp.full((embed_dim, seg_w), 1.0 / float(embed_dim), jnp.float32))
        self._wblk = wblk
        self._b2d = b2d
        self._g2d = g2d
        self._beta2d = beta2d
        self._bmean = bmean

    def __call__(self, x):
        B, C, H, W = x.shape
        assert H == self.img_size[0] and W == self.img_size[1], (
            f"Input image size ({H}*{W}) doesn't match model "
            f"({self.img_size[0]}*{self.img_size[1]}).")
        ph, pw = self.patch_size
        Hp, Wp = H // ph, W // pw
        E, K, Kp = self.embed_dim, self._K, self._Kp
        pack, n_pad = self._pack, self._n_pad

        # --- glue: extract non-overlapping patches (reshapes/transposes) -----
        # Cast to compute_dtype BEFORE the relayout so the HBM->HBM transpose
        # moves half the bytes when compute_dtype=bf16.
        # TODO(synk): fuse the NCHW patch gather into the kernel via a
        # (1, C, 1, ph, W) BlockSpec over a [B, C, Hp, ph, W] view + in-VMEM
        # rearrangement, dropping this full-size HBM copy entirely.
        x = x.astype(self.compute_dtype)
        patches = x.reshape(B, C, Hp, ph, Wp, pw).transpose(0, 2, 4, 1, 3, 5)
        patches = patches.reshape(B * Hp * Wp, K)
        M = patches.shape[0]

        # --- row tiling: >=4 near-equal tiles of <=512 rows (multiple of 8) ---
        Mr = pl.cdiv(M, pack)                       # packed row count
        target_steps = max(4, pl.cdiv(Mr, 512))
        TM = _round_up(pl.cdiv(Mr, target_steps), 8)
        Mr_pad = _round_up(Mr, TM)
        grid = (Mr_pad // TM,)

        Mp_total = Mr_pad * pack                    # padded patch count
        if Mp_total != M:
            patches = jnp.pad(patches, ((0, Mp_total - M), (0, 0)))
        lhs = patches.reshape(Mr_pad, Kp)           # contiguous, free

        x_bytes = jnp.dtype(self.compute_dtype).itemsize
        out_bytes = jnp.dtype(self.out_dtype).itemsize
        flops = 2 * Mr_pad * Kp * n_pad
        if self.use_norm:
            flops += 4 * Mr_pad * n_pad * n_pad     # two segment-sum matmuls
        cost = pl.CostEstimate(
            flops=flops,
            bytes_accessed=(Mr_pad * Kp * x_bytes + Kp * n_pad * x_bytes
                            + Mr_pad * n_pad * out_bytes),
            transcendentals=Mr_pad * n_pad if self.use_norm else 0)
        cparams = pltpu.CompilerParams(
            dimension_semantics=("parallel",),      # megacore sharding on v7x
            vmem_limit_bytes=32 * 1024 * 1024)      # safe on v7x's 64 MiB too

        in_specs = [
            pl.BlockSpec((TM, Kp), lambda i: (i, 0)),       # packed patch rows
            pl.BlockSpec((Kp, n_pad), lambda i: (0, 0)),    # block-diag weight
            pl.BlockSpec((1, n_pad), lambda i: (0, 0)),     # bias
        ]
        out_spec = pl.BlockSpec((TM, n_pad), lambda i: (i, 0))
        out_shape = jax.ShapeDtypeStruct((Mr_pad, n_pad), self.out_dtype)

        if self.use_norm:
            kernel = functools.partial(_proj_norm_kernel, eps=self.eps)
            in_specs = in_specs + [
                pl.BlockSpec((1, n_pad), lambda i: (0, 0)),      # gamma
                pl.BlockSpec((1, n_pad), lambda i: (0, 0)),      # beta
                pl.BlockSpec((n_pad, n_pad), lambda i: (0, 0)),  # segment-mean mat
            ]
            out = pl.pallas_call(
                kernel, out_shape=out_shape, grid=grid,
                in_specs=in_specs, out_specs=out_spec,
                compiler_params=cparams, cost_estimate=cost,
            )(lhs, self._wblk, self._b2d, self._g2d, self._beta2d, self._bmean)
        else:
            out = pl.pallas_call(
                _proj_kernel, out_shape=out_shape, grid=grid,
                in_specs=in_specs, out_specs=out_spec,
                compiler_params=cparams, cost_estimate=cost,
            )(lhs, self._wblk, self._b2d)

        # Unpack: every lane is real when pack*E == n_pad -> free reshape;
        # otherwise (pack==1 with lane padding) slice the real columns.
        if pack * E == n_pad:
            out = out.reshape(Mp_total, E)[:M]
        else:
            out = out[:M, :E]
        return out.reshape(B, Hp * Wp, E)


def _reference(x, conv_w, conv_b):
    """Pure-JAX reference: strided conv == patch matmul, then flatten+transpose."""
    y = jax.lax.conv_general_dilated(
        x.astype(jnp.float32), conv_w,
        window_strides=conv_w.shape[2:], padding="VALID",
        dimension_numbers=("NCHW", "OIHW", "NCHW"))
    y = y + conv_b.reshape(1, -1, 1, 1)
    B, E, Hp, Wp = y.shape
    return y.reshape(B, E, Hp * Wp).transpose(0, 2, 1)


def _layernorm_ref(y, gamma, beta, eps=1e-5):
    mean = jnp.mean(y, axis=-1, keepdims=True)
    var = jnp.mean((y - mean) ** 2, axis=-1, keepdims=True)
    return (y - mean) * jax.lax.rsqrt(var + eps) * gamma + beta


if __name__ == "__main__":
    key = jax.random.PRNGKey(0)
    k_x, k_p = jax.random.split(key)

    B, C, H, W = 2, 4, 16, 16
    patch_size, embed_dim = 4, 32
    x = jax.random.normal(k_x, (B, C, H, W), dtype=jnp.float32)

    # 1) Default config (norm_layer=None): projection only, exact f32 math.
    mod = PatchEmbedPallas(img_size=H, patch_size=patch_size, in_chans=C,
                           embed_dim=embed_dim, use_norm=False,
                           compute_dtype=jnp.float32, key=k_p)
    out = jax.block_until_ready(mod(x))
    ref = _reference(x, mod.conv_w, mod.conv_b)
    assert out.shape == (B, (H // patch_size) * (W // patch_size), embed_dim)
    assert jnp.allclose(out, ref, atol=1e-4, rtol=1e-4)

    # 2) LayerNorm variant: bf16 inputs/outputs, f32 MXU accumulation + f32 LN
    #    math inside the kernel (looser tolerance for bf16 rounding).
    mod_n = PatchEmbedPallas(img_size=H, patch_size=patch_size, in_chans=C,
                             embed_dim=embed_dim, use_norm=True,
                             compute_dtype=jnp.bfloat16, key=k_p)
    out_n = jax.block_until_ready(mod_n(x))
    ref_n = _layernorm_ref(_reference(x, mod_n.conv_w, mod_n.conv_b),
                           mod_n.ln_gamma, mod_n.ln_beta)
    assert out_n.shape == (B, (H // patch_size) * (W // patch_size), embed_dim)
    assert jnp.allclose(out_n.astype(jnp.float32), ref_n, atol=2e-2, rtol=2e-2)

    print("KERNEL_OK")
</pallas_src>

<mosaic_0001>
module attributes {stable_mosaic.version = 11 : i64} {
  func.func @_proj_kernel(%arg0: i32, %arg1: memref<8x256xf32, #tpu.memory_space<vmem>>, %arg2: memref<256x128xf32, #tpu.memory_space<vmem>>, %arg3: memref<1x128xf32, #tpu.memory_space<vmem>>, %arg4: memref<8x128xf32, #tpu.memory_space<vmem>>) attributes {dimension_semantics = [#tpu.dimension_semantics<parallel>], iteration_bounds = array<i64: 1>, scalar_prefetch = 0 : i64, scratch_operands = 0 : i64, tpu.core_type = #tpu.core_type<tc>, window_params = [{transform_indices = @transform_0, window_bounds = array<i64: 8, 256>}, {pipeline_mode = #tpu.pipeline_mode<synchronous>, transform_indices = @transform_1, window_bounds = array<i64: 256, 128>}, {pipeline_mode = #tpu.pipeline_mode<synchronous>, transform_indices = @transform_2, window_bounds = array<i64: 1, 128>}, {transform_indices = @transform_3, window_bounds = array<i64: 8, 128>}]} {
    %c0 = arith.constant 0 : index
    %c0_0 = arith.constant 0 : index
    %0 = vector.load %arg1[%c0, %c0_0] : memref<8x256xf32, #tpu.memory_space<vmem>>, vector<8x256xf32>
    %c0_1 = arith.constant 0 : index
    %c0_2 = arith.constant 0 : index
    %1 = vector.load %arg2[%c0_1, %c0_2] : memref<256x128xf32, #tpu.memory_space<vmem>>, vector<256x128xf32>
    %cst = arith.constant dense<0.000000e+00> : vector<8x128xf32>
    %2 = tpu.matmul %0, %1, %cst {dimension_numbers = #tpu.dot_dimension_numbers<[1], [0], [0], [1], [0, 0, 1, 1], [], []>} : vector<8x256xf32>, vector<256x128xf32>, vector<8x128xf32> -> vector<8x128xf32>
    %c0_3 = arith.constant 0 : index
    %c0_4 = arith.constant 0 : index
    %3 = vector.load %arg3[%c0_3, %c0_4] : memref<1x128xf32, #tpu.memory_space<vmem>>, vector<1x128xf32>
    %4 = vector.broadcast %3 : vector<1x128xf32> to vector<8x128xf32>
    %5 = arith.addf %2, %4 : vector<8x128xf32>
    %c0_5 = arith.constant 0 : index
    %c0_6 = arith.constant 0 : index
    %6 = vector.load %arg4[%c0_5, %c0_6] : memref<8x128xf32, #tpu.memory_space<vmem>>, vector<8x128xf32>
    tpu.vector_store %arg4[%c0_5, %c0_6], %5 {strides = array<i32>} : memref<8x128xf32, #tpu.memory_space<vmem>>, vector<8x128xf32>,
    return
  }
  func.func @transform_0(%arg0: i32) -> (i32, i32) {
    %c0_i32 = arith.constant 0 : i32
    %c0_i32_0 = arith.constant 0 : i32
    return %arg0, %c0_i32 : i32, i32
  }
  func.func @transform_1(%arg0: i32) -> (i32, i32) {
    %c0_i32 = arith.constant 0 : i32
    %c0_i32_0 = arith.constant 0 : i32
    %c0_i32_1 = arith.constant 0 : i32
    return %c0_i32, %c0_i32_0 : i32, i32
  }
  func.func @transform_2(%arg0: i32) -> (i32, i32) {
    %c0_i32 = arith.constant 0 : i32
    %c0_i32_0 = arith.constant 0 : i32
    %c0_i32_1 = arith.constant 0 : i32
    return %c0_i32, %c0_i32_0 : i32, i32
  }
  func.func @transform_3(%arg0: i32) -> (i32, i32) {
    %c0_i32 = arith.constant 0 : i32
    %c0_i32_0 = arith.constant 0 : i32
    return %arg0, %c0_i32 : i32, i32
  }
}

</mosaic_0001>

<llo_original>
// kernel: tpu_custom_call.1
$region0: #{tpu_custom_call.1}
  #allocation0 [shape = 'u32[]', space=smem, size = 0x4, offset = 0x4, fixed_abs, tag = 'smem constant byte address 0x4 - core index']
  #allocation1 [shape = 'u32[144,128]{1,0:T(1,128)}', space=vmem, size = 0x12000, scoped, tag = 'internal scratch']
  %s0 = inlined_call_operand.hbm [shape: f32[8,256], index: 0, kind: input, shape index: {}]
  %s1 = inlined_call_operand.hbm [shape: f32[256,128], index: 1, kind: input, shape index: {}]
  %s2 = inlined_call_operand.vmem [shape: f32[1,128], index: 2, kind: input, shape index: {}]
  %s3 = inlined_call_operand.hbm [shape: f32[8,128], index: 3, kind: output, shape index: {}]
  %s4 = sld [smem:[#allocation0]]
  $region30: #{tpu_custom_call.1} parent=0
    _
  %s6 = ssub.s32 1, %s4
  %s7 = scalar_select 0, %s6, %s4
  $region1: #{tpu_custom_call.1} parent=0
    #allocation2 [shape = 'u8[8192]{0}', space=vmem, size = 0x2000, scoped, tag = 'input window, operand 0, single buffered']
    #allocation3 [shape = 's32[1]{0}', space=sflag, size = 0x4, scoped, tag = 'scoped memory for tpu_custom_call.1']
    #allocation4 [shape = 's32[1]{0}', space=sflag, size = 0x4, scoped, tag = 'scoped memory for tpu_custom_call.1']
    #allocation5 [shape = 'u8[131072]{0}', space=vmem, size = 0x20000, scoped, tag = 'input window, operand 1, single buffered']
    #allocation6 [shape = 's32[1]{0}', space=sflag, size = 0x4, scoped, tag = 'scoped memory for tpu_custom_call.1']
    #allocation7 [shape = 'u8[4096]{0}', space=vmem, size = 0x1000, scoped, tag = 'output window, operand 0, single buffered']
    %8 = vsyncpa [#allocation3], 0
    %9 = vsyncpa [#allocation6], 0
    %10 = vsyncpa [#allocation4], 0
    // Predicated region
    $region2: #{tpu_custom_call.1} parent=1 // pred_check
      _
    $region3: #{tpu_custom_call.1} parent=1 // pred_check_branch
      %12 = sbr.rel (0) target = $region5
    $region4: #{tpu_custom_call.1} parent=1 // pred_region
      %s14 = ssub.s32 256, 256
      %15 = vsyncadd [#allocation3], %s14
      %s17 = sshll.u32 [#allocation2], 4
      %s18 = int_to_ptr.vmem [resolvable:$true] %s17
      %20 = dma.hbm_to_vmem [thread:$0]  %s0, 256, %s18, [#allocation3]
    $region5: #{tpu_custom_call.1} parent=1 // pred_fallthru
      _
    // Predicated region
    $region6: #{tpu_custom_call.1} parent=1 // pred_check
      _
    $region7: #{tpu_custom_call.1} parent=1 // pred_check_branch
      %22 = sbr.rel (0) target = $region9
    $region8: #{tpu_custom_call.1} parent=1 // pred_region
      %s24 = ssub.s32 4096, 4096
      %25 = vsyncadd [#allocation6], %s24
      %s26 = sshll.u32 [#allocation5], 4
      %s27 = int_to_ptr.vmem [resolvable:$true] %s26
      %32 = dma.hbm_to_vmem [thread:$0]  %s1, 4096, %s27, [#allocation6], 128, 128, 8
    $region9: #{tpu_custom_call.1} parent=1 // pred_fallthru
      _
    // Predicated region
    $region10: #{tpu_custom_call.1} parent=1 // pred_check
      _
    $region11: #{tpu_custom_call.1} parent=1 // pred_check_branch
      %34 = sbr.rel (0) target = $region13
    $region12: #{tpu_custom_call.1} parent=1 // pred_region
      _
    $region13: #{tpu_custom_call.1} parent=1 // pred_fallthru
      _
    // Predicated region
    $region14: #{tpu_custom_call.1} parent=1 // pred_check
      _
    $region15: #{tpu_custom_call.1} parent=1 // pred_check_branch
      %36 = sbr.rel (0) target = $region17
    $region16: #{tpu_custom_call.1} parent=1 // pred_region
      %37 = dma.done [#allocation3], 256
    $region17: #{tpu_custom_call.1} parent=1 // pred_fallthru
      _
    // Predicated region
    $region18: #{tpu_custom_call.1} parent=1 // pred_check
      _
    $region19: #{tpu_custom_call.1} parent=1 // pred_check_branch
      %39 = sbr.rel (0) target = $region21
    $region20: #{tpu_custom_call.1} parent=1 // pred_region
      %40 = dma.done [#allocation6], 4096
    $region21: #{tpu_custom_call.1} parent=1 // pred_fallthru
      _
    %v41 = vld [vmem:[#allocation2] sm:$0xff]
    %v42 = vld [vmem:[#allocation2 + $0x8] sm:$0xff]
    %v43 = vld [vmem:[#allocation5] sm:$0xff]
    %v44 = vld [vmem:[#allocation5 + $0x8] sm:$0xff]
    %v45 = vld [vmem:[#allocation5 + $0x10] sm:$0xff]
    %v46 = vld [vmem:[#allocation5 + $0x18] sm:$0xff]
    %v47 = vld [vmem:[#allocation5 + $0x20] sm:$0xff]
    %v48 = vld [vmem:[#allocation5 + $0x28] sm:$0xff]
    %v49 = vld [vmem:[#allocation5 + $0x30] sm:$0xff]
    %v50 = vld [vmem:[#allocation5 + $0x38] sm:$0xff]
    %v51 = vld [vmem:[#allocation5 + $0x40] sm:$0xff]
    %v52 = vld [vmem:[#allocation5 + $0x48] sm:$0xff]
    %v53 = vld [vmem:[#allocation5 + $0x50] sm:$0xff]
    %v54 = vld [vmem:[#allocation5 + $0x58] sm:$0xff]
    %v55 = vld [vmem:[#allocation5 + $0x60] sm:$0xff]
    %v56 = vld [vmem:[#allocation5 + $0x68] sm:$0xff]
    %v57 = vld [vmem:[#allocation5 + $0x70] sm:$0xff]
    %v58 = vld [vmem:[#allocation5 + $0x78] sm:$0xff]
    %v59 = vld [vmem:[#allocation5 + $0x80] sm:$0xff]
    %v60 = vld [vmem:[#allocation5 + $0x88] sm:$0xff]
    %v61 = vld [vmem:[#allocation5 + $0x90] sm:$0xff]
    %v62 = vld [vmem:[#allocation5 + $0x98] sm:$0xff]
    %v63 = vld [vmem:[#allocation5 + $0xa0] sm:$0xff]
    %v64 = vld [vmem:[#allocation5 + $0xa8] sm:$0xff]
    %v65 = vld [vmem:[#allocation5 + $0xb0] sm:$0xff]
    %v66 = vld [vmem:[#allocation5 + $0xb8] sm:$0xff]
    %v67 = vld [vmem:[#allocation5 + $0xc0] sm:$0xff]
    %v68 = vld [vmem:[#allocation5 + $0xc8] sm:$0xff]
    %v69 = vld [vmem:[#allocation5 + $0xd0] sm:$0xff]
    %v70 = vld [vmem:[#allocation5 + $0xd8] sm:$0xff]
    %v71 = vld [vmem:[#allocation5 + $0xe0] sm:$0xff]
    %v72 = vld [vmem:[#allocation5 + $0xe8] sm:$0xff]
    %v73 = vld [vmem:[#allocation5 + $0xf0] sm:$0xff]
    %v74 = vld [vmem:[#allocation5 + $0xf8] sm:$0xff]
    %v75 = vld [vmem:[%s2] sm:$0x1]
    %v77 = vlaneseq
    %v78 = vshrl.u32 %v77, 7
    %v79 = vsub.s32 0, %v78
    %v80 = vrot.slane %v75, %v79
    %82 = vmatprep.subr.mxu0 0.0
    %83 = vmatpush1.msra.mxu0 %v58
    %84 = vmatprep.subr.mxu0 0.0
    %85 = vmatpush1.msra.mxu0 %v57
    %86 = vmatprep.subr.mxu0 0.0
    %87 = vmatpush1.msra.mxu0 %v56
    %88 = vmatprep.subr.mxu0 0.0
    %89 = vmatpush1.msra.mxu0 %v55
    %90 = vmatprep.subr.mxu0 0.0
    %91 = vmatpush1.msra.mxu0 %v54
    %92 = vmatprep.subr.mxu0 0.0
    %93 = vmatpush1.msra.mxu0 %v53
    %94 = vmatprep.subr.mxu0 0.0
    %95 = vmatpush1.msra.mxu0 %v52
    %96 = vmatprep.subr.mxu0 0.0
    %97 = vmatpush1.msra.mxu0 %v51
    %98 = vmatprep.subr.mxu0 0.0
    %99 = vmatpush1.msra.mxu0 %v50
    %100 = vmatprep.subr.mxu0 0.0
    %101 = vmatpush1.msra.mxu0 %v49
    %102 = vmatprep.subr.mxu0 0.0
    %103 = vmatpush1.msra.mxu0 %v48
    %104 = vmatprep.subr.mxu0 0.0
    %105 = vmatpush1.msra.mxu0 %v47
    %106 = vmatprep.subr.mxu0 0.0
    %107 = vmatpush1.msra.mxu0 %v46
    %108 = vmatprep.subr.mxu0 0.0
    %109 = vmatpush1.msra.mxu0 %v45
    %110 = vmatprep.subr.mxu0 0.0
    %111 = vmatpush1.msra.mxu0 %v44
    %112 = vmatprep.subr.mxu0 0.0
    %113 = vmatpush1.msra.mxu0 %v43
    %114 = vmatprep.subr.mxu0 0.0
    %115 = vmatpush2.msra.mxu0 %v74
    %116 = vmatprep.subr.mxu0 0.0
    %117 = vmatpush2.msra.mxu0 %v73
    %118 = vmatprep.subr.mxu0 0.0
    %119 = vmatpush2.msra.mxu0 %v72
    %120 = vmatprep.subr.mxu0 0.0
    %121 = vmatpush2.msra.mxu0 %v71
    %122 = vmatprep.subr.mxu0 0.0
    %123 = vmatpush2.msra.mxu0 %v70
    %124 = vmatprep.subr.mxu0 0.0
    %125 = vmatpush2.msra.mxu0 %v69
    %126 = vmatprep.subr.mxu0 0.0
    %127 = vmatpush2.msra.mxu0 %v68
    %128 = vmatprep.subr.mxu0 0.0
    %129 = vmatpush2.msra.mxu0 %v67
    %130 = vmatprep.subr.mxu0 0.0
    %131 = vmatpush2.msra.mxu0 %v66
    %132 = vmatprep.subr.mxu0 0.0
    %133 = vmatpush2.msra.mxu0 %v65
    %134 = vmatprep.subr.mxu0 0.0
    %135 = vmatpush2.msra.mxu0 %v64
    %136 = vmatprep.subr.mxu0 0.0
    %137 = vmatpush2.msra.mxu0 %v63
    %138 = vmatprep.subr.mxu0 0.0
    %139 = vmatpush2.msra.mxu0 %v62
    %140 = vmatprep.subr.mxu0 0.0
    %141 = vmatpush2.msra.mxu0 %v61
    %142 = vmatprep.subr.mxu0 0.0
    %143 = vmatpush2.msra.mxu0 %v60
    %144 = vmatprep.subr.mxu0 0.0
    %145 = vmatpush2.msra.mxu0 %v59
    %146 = vmatprep.mubr.f32.mxu0 %v42
    %147 = vmatmul.mubr.f32.gmra.mxu0 %v41
    %v148 = vpop.f32.mrf.mxu0
    %v149 = vadd.f32 %v80, %v148
    %v150 = vpop.f32.mrf.mxu0
    %151 = vdwg.mxu0
    %152 = vst [vmem:[#allocation7] sm:$0xff] %v149
    // Predicated region
    $region22: #{tpu_custom_call.1} parent=1 // pred_check
      _
    $region23: #{tpu_custom_call.1} parent=1 // pred_check_branch
      %154 = sbr.rel (0) target = $region25
    $region24: #{tpu_custom_call.1} parent=1 // pred_region
      %s156 = ssub.s32 128, 128
      %157 = vsyncadd [#allocation4], %s156
      %s159 = sshll.u32 [#allocation7], 4
      %s160 = int_to_ptr.vmem [resolvable:$true] %s159
      %162 = dma.vmem_to_hbm [thread:$0]  %s160, 128, %s3, [#allocation4]
    $region25: #{tpu_custom_call.1} parent=1 // pred_fallthru
      _
    // Predicated region
    $region26: #{tpu_custom_call.1} parent=1 // pred_check
      _
    $region27: #{tpu_custom_call.1} parent=1 // pred_check_branch
      %164 = sbr.rel (0) target = $region29
    $region28: #{tpu_custom_call.1} parent=1 // pred_region
      %165 = dma.done [#allocation4], 128
    $region29: #{tpu_custom_call.1} parent=1 // pred_fallthru
      _
    %166 = vsyncpa [#allocation3], 1
    %167 = vsyncpa [#allocation6], 1
    %168 = vsyncpa [#allocation4], 1

</llo_original>
